<compile_context>
chip_gen: v7x
topology: tpu7x:2x2x1
jax: 0.10.0
libtpu: 0.0.40
codegen_flags: <defaults>
</compile_context>

<pallas_src>
import functools

import jax
import jax.numpy as jnp
from jax.experimental import pallas as pl
from jax.experimental.pallas import tpu as pltpu


# ---------------------------------------------------------------- kernels ---

def _ffn_kernel(x_ref, w1_ref, w2_ref, o_ref, *scratch):
    # grid = (row tiles, d_ff tiles); d_ff (k) is the reduction axis of matmul 2.
    acc_ref = scratch[0] if scratch else o_ref   # fp32 out -> accumulate in place
    k = pl.program_id(1)

    @pl.when(k == 0)
    def _():
        acc_ref[...] = jnp.zeros_like(acc_ref)

    h = jnp.dot(x_ref[...], w1_ref[...], preferred_element_type=jnp.float32)
    h = jnp.maximum(h, 0.0)
    acc_ref[...] += jnp.dot(h.astype(w2_ref.dtype), w2_ref[...],
                            preferred_element_type=jnp.float32)

    if scratch:
        @pl.when(k == pl.num_programs(1) - 1)
        def _():
            o_ref[...] = acc_ref[...].astype(o_ref.dtype)


def _ffn_gated_kernel(x_ref, w1_ref, wg_ref, w2_ref, o_ref, *scratch):
    acc_ref = scratch[0] if scratch else o_ref
    k = pl.program_id(1)

    @pl.when(k == 0)
    def _():
        acc_ref[...] = jnp.zeros_like(acc_ref)

    x = x_ref[...]
    h = jnp.maximum(
        jnp.dot(x, w1_ref[...], preferred_element_type=jnp.float32), 0.0)
    g = jnp.dot(x, wg_ref[...], preferred_element_type=jnp.float32)
    hg = h * g
    acc_ref[...] += jnp.dot(hg.astype(w2_ref.dtype), w2_ref[...],
                            preferred_element_type=jnp.float32)

    if scratch:
        @pl.when(k == pl.num_programs(1) - 1)
        def _():
            o_ref[...] = acc_ref[...].astype(o_ref.dtype)


# ---------------------------------------------------------------- helpers ---

def _round_up(x, m):
    return (x + m - 1) // m * m


def _vmem_capacity_bytes():
    """Physical VMEM of the current TPU generation (conservative fallback)."""
    try:
        return int(pltpu.get_tpu_info().vmem_capacity_bytes)
    except Exception:
        return 64 << 20   # v7x-sized fallback: always safe


def _vmem_estimate(tm, d_model, tk, xb, wb, gated, use_scratch):
    """Per-grid-step VMEM working set (double-buffered BlockSpec DMAs)."""
    est = 2 * tm * d_model * xb                 # x tile
    est += 2 * tm * d_model * xb                # out tile
    est += 2 * d_model * tk * wb                # W1 tile
    if gated:
        est += 2 * d_model * tk * wb            # Wg tile
    est += 2 * tk * d_model * wb                # W2 tile
    if use_scratch:
        est += tm * d_model * 4                 # fp32 accumulator scratch
    est += tm * tk * 4 * (2 if gated else 1)    # fp32 intermediates h (and g)
    return est


def _auto_tile_m(d_model, tk, xb, wb, gated, use_scratch, vmem_cap, sub):
    budget = int(0.70 * vmem_cap)
    tm = 1024 if vmem_cap >= (96 << 20) else 512
    while tm > sub and _vmem_estimate(tm, d_model, tk, xb, wb,
                                      gated, use_scratch) > budget:
        tm //= 2
    return max(tm, sub)


# ------------------------------------------------------- weight preparation ---

def prepare_ffn_weights(w1t, w2t, wgt=None, *, tile_k=None):
    """Pre-block FFN weights ONCE (cache the result with the weights).

    Inputs are the transposed PyTorch Linear weights (in_features, out_features):
      w1t: (d_model, d_ff), w2t: (d_ff, d_model), wgt: optional (d_model, d_ff).
    Returns (w1b, w2b, wgb) with:
      w1b / wgb: (nk, d_model, tk)  -- contiguous per d_ff tile
      w2b:       (nk, tk, d_model)
    d_ff is zero-padded to a multiple of tk (padding contributes 0 to the FFN).
    """
    d_model, d_ff = w1t.shape
    if tile_k is None:
        tile_k = 512 if _vmem_capacity_bytes() >= (96 << 20) else 256
    tk = d_ff if d_ff <= tile_k else tile_k
    d_ff_pad = _round_up(d_ff, tk)
    nk = d_ff_pad // tk

    def block_in(w):
        if d_ff_pad != d_ff:
            w = jnp.pad(w, ((0, 0), (0, d_ff_pad - d_ff)))
        return jnp.transpose(w.reshape(d_model, nk, tk), (1, 0, 2))

    w1b = block_in(w1t)
    wgb = block_in(wgt) if wgt is not None else None

    w2 = w2t
    if d_ff_pad != d_ff:
        w2 = jnp.pad(w2, ((0, d_ff_pad - d_ff), (0, 0)))
    w2b = w2.reshape(nk, tk, d_model)
    return w1b, w2b, wgb


# ---------------------------------------------------------------- wrapper ---

@functools.partial(jax.jit, static_argnames=("tile_m",))
def feed_forward(x, w1b, w2b, wgb=None, *, tile_m=None):
    """x: (B, S, d_model). w1b/w2b/wgb: pre-blocked weights (prepare_ffn_weights)."""
    B, S, d_model = x.shape
    nk, _, tk = w1b.shape
    d_ff_pad = nk * tk
    gated = wgb is not None

    M = B * S
    xf = x.reshape(M, d_model)

    xb = jnp.dtype(x.dtype).itemsize
    wb = jnp.dtype(w1b.dtype).itemsize
    sub = {4: 8, 2: 16, 1: 32}.get(xb, 8)            # dtype-aware sublane pack
    use_scratch = x.dtype != jnp.float32             # fp32 out: accumulate in o_ref
    vmem_cap = _vmem_capacity_bytes()

    # --- tile selection ------------------------------------------------------
    if tile_m is None:
        tile_m = _auto_tile_m(d_model, tk, xb, wb, gated, use_scratch,
                              vmem_cap, sub)
    tm = min(tile_m, _round_up(M, sub))
    M_pad = _round_up(M, tm)
    # Prefer >=2 row tiles so the "parallel" axis can shard across 2 TCs (v7x).
    if M_pad // tm < 2 and M >= 2 * sub:
        tm = _round_up(-(-M // 2), sub)
        M_pad = _round_up(M, tm)
    if M_pad != M:
        xf = jnp.pad(xf, ((0, M_pad - M), (0, 0)))
    grid = (M_pad // tm, nk)

    # --- specs ----------------------------------------------------------------
    x_spec = pl.BlockSpec((tm, d_model), lambda i, k: (i, 0))
    w1_spec = pl.BlockSpec((None, d_model, tk), lambda i, k: (k, 0, 0))
    wg_spec = pl.BlockSpec((None, d_model, tk), lambda i, k: (k, 0, 0))
    w2_spec = pl.BlockSpec((None, tk, d_model), lambda i, k: (k, 0, 0))
    o_spec = pl.BlockSpec((tm, d_model), lambda i, k: (i, 0))

    if gated:
        kernel = _ffn_gated_kernel
        in_specs = [x_spec, w1_spec, wg_spec, w2_spec]
        args = (xf, w1b, wgb, w2b)
    else:
        kernel = _ffn_kernel
        in_specs = [x_spec, w1_spec, w2_spec]
        args = (xf, w1b, w2b)

    scratch_shapes = ([pltpu.VMEM((tm, d_model), jnp.float32)]
                      if use_scratch else [])

    # --- VMEM budget (capped at real device capacity) + cost estimate ---------
    vmem_est = _vmem_estimate(tm, d_model, tk, xb, wb, gated, use_scratch)
    vmem_limit = int(min(max(vmem_est * 3 // 2 + (2 << 20), 16 << 20),
                         int(0.90 * vmem_cap)))

    n_row_tiles = M_pad // tm
    weight_bytes = (w1b.size + w2b.size + (wgb.size if gated else 0)) * wb
    cost = pl.CostEstimate(
        flops=2 * M_pad * d_model * d_ff_pad * (3 if gated else 2),
        transcendentals=0,
        bytes_accessed=(xf.size * xb + M_pad * d_model * xb
                        + weight_bytes * n_row_tiles),
    )

    out = pl.pallas_call(
        kernel,
        out_shape=jax.ShapeDtypeStruct((M_pad, d_model), x.dtype),
        grid_spec=pltpu.PrefetchScalarGridSpec(
            num_scalar_prefetch=0,
            grid=grid,
            in_specs=in_specs,
            out_specs=o_spec,
            scratch_shapes=scratch_shapes,
        ),
        compiler_params=pltpu.CompilerParams(
            dimension_semantics=("parallel", "arbitrary"),
            vmem_limit_bytes=vmem_limit,
        ),
        cost_estimate=cost,
    )(*args)

    if M_pad != M:
        out = out[:M]
    return out.reshape(B, S, d_model)


# ------------------------------------------------------------------- main ---

if __name__ == "__main__":
    # Small shapes consistent with the module: (batch, seq, d_model)
    B, S, d_model, d_ff = 2, 8, 32, 64

    key = jax.random.PRNGKey(0)
    kx, k1, k2, kg = jax.random.split(key, 4)

    x = jax.random.normal(kx, (B, S, d_model), dtype=jnp.float32)
    # PyTorch Linear stores weight as (out, in); we use the transposed layout.
    w1t = jax.random.normal(k1, (d_model, d_ff), dtype=jnp.float32) * 0.05
    w2t = jax.random.normal(k2, (d_ff, d_model), dtype=jnp.float32) * 0.05
    wgt = jax.random.normal(kg, (d_model, d_ff), dtype=jnp.float32) * 0.05

    # Non-gated (module defaults: is_gated=False, bias=False, ReLU, dropout skipped)
    w1b, w2b, _ = prepare_ffn_weights(w1t, w2t)
    y = jax.block_until_ready(feed_forward(x, w1b, w2b))

    # Gated variant (is_gated=True)
    w1b_g, w2b_g, wgb_g = prepare_ffn_weights(w1t, w2t, wgt)
    yg = jax.block_until_ready(feed_forward(x, w1b_g, w2b_g, wgb_g))

    # Reference check in plain JAX
    xf = x.reshape(-1, d_model)
    ref = (jnp.maximum(xf @ w1t, 0.0) @ w2t).reshape(B, S, d_model)
    ref_g = ((jnp.maximum(xf @ w1t, 0.0) * (xf @ wgt)) @ w2t).reshape(B, S, d_model)

    assert jnp.allclose(y, ref, atol=1e-5, rtol=1e-5)
    assert jnp.allclose(yg, ref_g, atol=1e-5, rtol=1e-5)

    print("KERNEL_OK")
</pallas_src>

<mosaic_0001>
module attributes {stable_mosaic.version = 11 : i64} {
  func.func @_ffn_kernel(%arg0: i32, %arg1: i32, %arg2: memref<8x32xf32, #tpu.memory_space<vmem>>, %arg3: memref<1x32x64xf32, #tpu.memory_space<vmem>>, %arg4: memref<1x64x32xf32, #tpu.memory_space<vmem>>, %arg5: memref<8x32xf32, #tpu.memory_space<vmem>>) attributes {dimension_semantics = [#tpu.dimension_semantics<parallel>, #tpu.dimension_semantics<arbitrary>], iteration_bounds = array<i64: 2, 1>, scalar_prefetch = 0 : i64, scratch_operands = 0 : i64, tpu.core_type = #tpu.core_type<tc>, window_params = [{transform_indices = @transform_0, window_bounds = array<i64: 8, 32>}, {transform_indices = @transform_1, window_bounds = array<i64: 1, 32, 64>}, {transform_indices = @transform_2, window_bounds = array<i64: 1, 64, 32>}, {transform_indices = @transform_3, window_bounds = array<i64: 8, 32>}]} {
    %c0_i32 = arith.constant 0 : i32
    %0 = arith.cmpi eq, %arg1, %c0_i32 : i32
    %1 = arith.extui %0 : i1 to i32
    %c0_i32_0 = arith.constant 0 : i32
    %2 = arith.cmpi ne, %1, %c0_i32_0 : i32
    scf.if %2 {
      %cst_14 = arith.constant 0.000000e+00 : f32
      %15 = vector.broadcast %cst_14 : f32 to vector<8x32xf32>
      %c0_15 = arith.constant 0 : index
      %c0_16 = arith.constant 0 : index
      %16 = vector.load %arg5[%c0_15, %c0_16] : memref<8x32xf32, #tpu.memory_space<vmem>>, vector<8x32xf32>
      tpu.vector_store %arg5[%c0_15, %c0_16], %15 {strides = array<i32>} : memref<8x32xf32, #tpu.memory_space<vmem>>, vector<8x32xf32>,
    } else {
    }
    %c0 = arith.constant 0 : index
    %c0_1 = arith.constant 0 : index
    %3 = vector.load %arg2[%c0, %c0_1] : memref<8x32xf32, #tpu.memory_space<vmem>>, vector<8x32xf32>
    %c0_2 = arith.constant 0 : index
    %c0_3 = arith.constant 0 : index
    %c0_4 = arith.constant 0 : index
    %4 = vector.load %arg3[%c0_2, %c0_3, %c0_4] : memref<1x32x64xf32, #tpu.memory_space<vmem>>, vector<1x32x64xf32>
    %5 = vector.shape_cast %4 : vector<1x32x64xf32> to vector<32x64xf32>
    %cst = arith.constant dense<0.000000e+00> : vector<8x64xf32>
    %6 = tpu.matmul %3, %5, %cst {dimension_numbers = #tpu.dot_dimension_numbers<[1], [0], [0], [1], [0, 0, 1, 1], [], []>} : vector<8x32xf32>, vector<32x64xf32>, vector<8x64xf32> -> vector<8x64xf32>
    %cst_5 = arith.constant 0.000000e+00 : f32
    %7 = vector.broadcast %cst_5 : f32 to vector<8x64xf32>
    %8 = arith.maximumf %6, %7 : vector<8x64xf32>
    %c0_6 = arith.constant 0 : index
    %c0_7 = arith.constant 0 : index
    %9 = vector.load %arg5[%c0_6, %c0_7] : memref<8x32xf32, #tpu.memory_space<vmem>>, vector<8x32xf32>
    %c0_8 = arith.constant 0 : index
    %c0_9 = arith.constant 0 : index
    %c0_10 = arith.constant 0 : index
    %10 = vector.load %arg4[%c0_8, %c0_9, %c0_10] : memref<1x64x32xf32, #tpu.memory_space<vmem>>, vector<1x64x32xf32>
    %11 = vector.shape_cast %10 : vector<1x64x32xf32> to vector<64x32xf32>
    %cst_11 = arith.constant dense<0.000000e+00> : vector<8x32xf32>
    %12 = tpu.matmul %8, %11, %cst_11 {dimension_numbers = #tpu.dot_dimension_numbers<[1], [0], [0], [1], [0, 0, 1, 1], [], []>} : vector<8x64xf32>, vector<64x32xf32>, vector<8x32xf32> -> vector<8x32xf32>
    %13 = arith.addf %9, %12 : vector<8x32xf32>
    %c0_12 = arith.constant 0 : index
    %c0_13 = arith.constant 0 : index
    %14 = vector.load %arg5[%c0_12, %c0_13] : memref<8x32xf32, #tpu.memory_space<vmem>>, vector<8x32xf32>
    tpu.vector_store %arg5[%c0_12, %c0_13], %13 {strides = array<i32>} : memref<8x32xf32, #tpu.memory_space<vmem>>, vector<8x32xf32>,
    return
  }
  func.func @transform_0(%arg0: i32, %arg1: i32) -> (i32, i32) {
    %c0_i32 = arith.constant 0 : i32
    %c0_i32_0 = arith.constant 0 : i32
    return %arg0, %c0_i32 : i32, i32
  }
  func.func @transform_1(%arg0: i32, %arg1: i32) -> (i32, i32, i32) {
    %c0_i32 = arith.constant 0 : i32
    %c0_i32_0 = arith.constant 0 : i32
    %c0_i32_1 = arith.constant 0 : i32
    return %arg1, %c0_i32, %c0_i32_0 : i32, i32, i32
  }
  func.func @transform_2(%arg0: i32, %arg1: i32) -> (i32, i32, i32) {
    %c0_i32 = arith.constant 0 : i32
    %c0_i32_0 = arith.constant 0 : i32
    %c0_i32_1 = arith.constant 0 : i32
    return %arg1, %c0_i32, %c0_i32_0 : i32, i32, i32
  }
  func.func @transform_3(%arg0: i32, %arg1: i32) -> (i32, i32) {
    %c0_i32 = arith.constant 0 : i32
    %c0_i32_0 = arith.constant 0 : i32
    return %arg0, %c0_i32 : i32, i32
  }
}

</mosaic_0001>

<llo_original>
// kernel: feed_forward.1
$region0: #{feed_forward.1}
  #allocation0 [shape = 'u32[]', space=smem, size = 0x4, offset = 0x4, fixed_abs, tag = 'smem constant byte address 0x4 - core index']
  #allocation1 [shape = 'u32[144,128]{1,0:T(1,128)}', space=vmem, size = 0x12000, scoped, tag = 'internal scratch']
  %s0 = inlined_call_operand.vmem [shape: f32[16,32], index: 0, kind: input, shape index: {}]
  %s1 = inlined_call_operand.vmem [shape: f32[1,32,64], index: 1, kind: input, shape index: {}]
  %s2 = inlined_call_operand.vmem [shape: f32[1,64,32], index: 2, kind: input, shape index: {}]
  %s3 = inlined_call_operand.hbm [shape: f32[16,32], index: 3, kind: output, shape index: {}]
  %s4 = sld [smem:[#allocation0]]
  $region49: #{feed_forward.1} parent=0
    _
  %s6 = ssub.s32 1, %s4
  %s7 = scalar_select 0, %s6, %s4
  $region1: #{feed_forward.1} parent=0
    #allocation2 [shape = 'u8[8192]{0}', space=vmem, size = 0x2000, scoped, tag = 'output window, operand 0']
    #allocation3 [shape = 's32[2]{0}', space=sflag, size = 0x8, scoped, tag = 'scoped memory for feed_forward.1']
    %8 = vsyncpa [#allocation3], 0
    %s9 = scalar_lea.sflag [#allocation3], 1
    %10 = vsyncpa %s9, 0
    loop: start=0, step=1, limit=4
    $region2: #{feed_forward.1} parent=1 // loop_pre_header
      _
    $region3: #{feed_forward.1} parent=1 // loop_header
      %s12 = sphi 0, %s16
      %p13 = scmp.ge.s32.totalorder %s12, 4
      %s19 = sphi 0, %s31
      %s20 = sphi 0, %s27
      %s21 = sphi 0, %s19
      %s22 = sphi 0, %s20
      %s23 = sphi 0, %s21
      %s24 = sphi 0, %s22
      %s34 = sphi 0, %s36
      %s37 = sphi 0, %s34
      %s38 = sphi 0, %s37
      %s54 = sphi 0, %s38
      %s60 = sphi 0, %s62
      %s63 = sphi 0, %s60
      %s64 = sphi 0, %s63
      %s80 = sphi 0, %s64
      %s86 = sphi 0, %s88
      %s89 = sphi 0, %s86
      %s90 = sphi 0, %s89
      %s106 = sphi 0, %s90
      %s112 = sphi 0, %s114
      %s115 = sphi 0, %s112
      %s116 = sphi 0, %s115
      %s132 = sphi 0, %s116
    $region4: #{feed_forward.1} parent=1 // loop_header_branch
      %15 = sbr.rel (%p13) target = $region8
    $region5: #{feed_forward.1} parent=1 // loop_body
      %s17 = ssub.s32 %s12, 1
      %s18 = ssub.s32 %s12, 2
      %s25 = sadd.s32 1, %s20
      %p26 = scmp.ge.s32.totalorder %s25, 1
      %s27 = scalar_select %p26, 0, %s25
      %s28 = sadd.s32 1, %s19
      %s29 = scalar_select %p26, %s28, %s19
      %p30 = scmp.ge.s32.totalorder %s29, 2
      %s31 = scalar_select %p30, 0, %s29
      %s32 = ssub.s32 %s19, %s31
      %p33 = scmp.eq.s32.totalorder %s32, 0
      %s35 = sadd.s32 %s34, 1
      %s36 = scalar_select %p33, %s34, %s35
      %p39 = pneg %p33
      %p40 = scmp.eq.s32.totalorder %s12, 1
      %p41 = por %p39, %p40
      %p42 = scmp.ne.s32.totalorder %s34, %s37
      %p43 = scmp.eq.s32.totalorder %s12, 0
      %p44 = por %p42, %p43
      %p45 = scmp.ne.s32.totalorder %s34, %s37
      %p46 = scmp.eq.s32.totalorder %s17, 1
      %p47 = por %p45, %p46
      %p48 = scmp.ne.s32.totalorder %s37, %s38
      %p49 = scmp.eq.s32.totalorder %s17, 0
      %p50 = por %p48, %p49
      %p51 = scmp.ne.s32.totalorder %s37, %s38
      %p52 = scmp.eq.s32.totalorder %s18, 1
      %p53 = por %p51, %p52
      %p55 = scmp.ne.s32.totalorder %s38, %s54
      %p56 = scmp.eq.s32.totalorder %s18, 0
      %p57 = por %p55, %p56
      %s58 = ssub.s32 %s20, %s27
      %p59 = scmp.eq.s32.totalorder %s58, 0
      %s61 = sadd.s32 %s60, 1
      %s62 = scalar_select %p59, %s60, %s61
      %p65 = pneg %p59
      %p66 = scmp.eq.s32.totalorder %s12, 1
      %p67 = por %p65, %p66
      %p68 = scmp.ne.s32.totalorder %s60, %s63
      %p69 = scmp.eq.s32.totalorder %s12, 0
      %p70 = por %p68, %p69
      %p71 = scmp.ne.s32.totalorder %s60, %s63
      %p72 = scmp.eq.s32.totalorder %s17, 1
      %p73 = por %p71, %p72
      %p74 = scmp.ne.s32.totalorder %s63, %s64
      %p75 = scmp.eq.s32.totalorder %s17, 0
      %p76 = por %p74, %p75
      %p77 = scmp.ne.s32.totalorder %s63, %s64
      %p78 = scmp.eq.s32.totalorder %s18, 1
      %p79 = por %p77, %p78
      %p81 = scmp.ne.s32.totalorder %s64, %s80
      %p82 = scmp.eq.s32.totalorder %s18, 0
      %p83 = por %p81, %p82
      %s84 = ssub.s32 %s20, %s27
      %p85 = scmp.eq.s32.totalorder %s84, 0
      %s87 = sadd.s32 %s86, 1
      %s88 = scalar_select %p85, %s86, %s87
      %p91 = pneg %p85
      %p92 = scmp.eq.s32.totalorder %s12, 1
      %p93 = por %p91, %p92
      %p94 = scmp.ne.s32.totalorder %s86, %s89
      %p95 = scmp.eq.s32.totalorder %s12, 0
      %p96 = por %p94, %p95
      %p97 = scmp.ne.s32.totalorder %s86, %s89
      %p98 = scmp.eq.s32.totalorder %s17, 1
      %p99 = por %p97, %p98
      %p100 = scmp.ne.s32.totalorder %s89, %s90
      %p101 = scmp.eq.s32.totalorder %s17, 0
      %p102 = por %p100, %p101
      %p103 = scmp.ne.s32.totalorder %s89, %s90
      %p104 = scmp.eq.s32.totalorder %s18, 1
      %p105 = por %p103, %p104
      %p107 = scmp.ne.s32.totalorder %s90, %s106
      %p108 = scmp.eq.s32.totalorder %s18, 0
      %p109 = por %p107, %p108
      %s110 = ssub.s32 %s19, %s31
      %p111 = scmp.eq.s32.totalorder %s110, 0
      %s113 = sadd.s32 %s112, 1
      %s114 = scalar_select %p111, %s112, %s113
      %p117 = pneg %p111
      %p118 = scmp.eq.s32.totalorder %s12, 1
      %p119 = por %p117, %p118
      %p120 = scmp.ne.s32.totalorder %s112, %s115
      %p121 = scmp.eq.s32.totalorder %s12, 0
      %p122 = por %p120, %p121
      %p123 = scmp.ne.s32.totalorder %s112, %s115
      %p124 = scmp.eq.s32.totalorder %s17, 1
      %p125 = por %p123, %p124
      %p126 = scmp.ne.s32.totalorder %s115, %s116
      %p127 = scmp.eq.s32.totalorder %s17, 0
      %p128 = por %p126, %p127
      %p129 = scmp.ne.s32.totalorder %s115, %s116
      %p130 = scmp.eq.s32.totalorder %s18, 1
      %p131 = por %p129, %p130
      %p133 = scmp.ne.s32.totalorder %s116, %s132
      %p134 = scmp.eq.s32.totalorder %s18, 0
      %p135 = por %p133, %p134
      %p136 = scmp.le.s32.totalorder 1, %s12
      %p137 = scmp.lt.s32.totalorder %s12, 3
      %p138 = pnand %p136, %p137
      %p139 = pneg %p138
      // Predicated region
      $region9: #{feed_forward.1} parent=5 // pred_check
        _
      $region10: #{feed_forward.1} parent=5 // pred_check_branch
        %141 = sbr.rel (%p138) target = $region12
      $region11: #{feed_forward.1} parent=5 // pred_region
        %s142 = ssub.s32 %s12, 1
        // Predicated region
        $region13: #{feed_forward.1} parent=11 // pred_check
          %p143 = pneg %p76
        $region14: #{feed_forward.1} parent=11 // pred_check_branch
          %145 = sbr.rel (%p143) target = $region16
        $region15: #{feed_forward.1} parent=11 // pred_region
          %p146 = scmp.lt.s32.totalorder %s22, 0
          %s147 = scalar_select %p146, %s22, 0
          %s148 = smul.addr %s147, 4
          %s149 = smul.addr %s148, 8
          %s150 = scalar_lea.vmem %s1, %s149
        $region16: #{feed_forward.1} parent=11 // pred_fallthru
          _
        // Predicated region
        $region17: #{feed_forward.1} parent=11 // pred_check
          %p151 = pneg %p102
        $region18: #{feed_forward.1} parent=11 // pred_check_branch
          %153 = sbr.rel (%p151) target = $region20
        $region19: #{feed_forward.1} parent=11 // pred_region
          %p154 = scmp.lt.s32.totalorder %s22, 0
          %s155 = scalar_select %p154, %s22, 0
          %s156 = smul.addr %s155, 8
          %s157 = smul.addr %s156, 8
          %s158 = scalar_lea.vmem %s2, %s157
        $region20: #{feed_forward.1} parent=11 // pred_fallthru
          _
      $region12: #{feed_forward.1} parent=5 // pred_fallthru
        _
      %p159 = scmp.lt.s32.totalorder %s12, 2
      // Predicated region
      $region21: #{feed_forward.1} parent=5 // pred_check
        %p160 = pneg %p159
      $region22: #{feed_forward.1} parent=5 // pred_check_branch
        %162 = sbr.rel (%p160) target = $region24
      $region23: #{feed_forward.1} parent=5 // pred_region
        // Predicated region
        $region25: #{feed_forward.1} parent=23 // pred_check
          %p163 = pneg %p44
        $region26: #{feed_forward.1} parent=23 // pred_check_branch
          %165 = sbr.rel (%p163) target = $region28
        $region27: #{feed_forward.1} parent=23 // pred_region
          %p166 = scmp.lt.s32.totalorder %s19, 1
          %s167 = scalar_select %p166, %s19, 1
          %s168 = smul.addr %s167, 8
          %s169 = scalar_lea.vmem %s0, %s168
        $region28: #{feed_forward.1} parent=23 // pred_fallthru
          _
      $region24: #{feed_forward.1} parent=5 // pred_fallthru
        _
      %p170 = scmp.le.s32.totalorder 1, %s12
      %p171 = scmp.lt.s32.totalorder %s12, 3
      %p172 = pnand %p170, %p171
      %p173 = pneg %p172
      // Predicated region
      $region29: #{feed_forward.1} parent=5 // pred_check
        _
      $region30: #{feed_forward.1} parent=5 // pred_check_branch
        %175 = sbr.rel (%p172) target = $region32
      $region31: #{feed_forward.1} parent=5 // pred_region
        %s176 = ssub.s32 %s12, 1
        %p177 = scmp.lt.s32.totalorder %s21, 1
        %s178 = scalar_select %p177, %s21, 1
        %s179 = smul.addr %s178, 8
        %s180 = scalar_lea.vmem %s0, %s179
        %p181 = pneg %p50
        %p182 = pneg %p47
        %p183 = scmp.lt.s32.totalorder %s22, 0
        %s184 = scalar_select %p183, %s22, 0
        %s185 = smul.addr %s184, 4
        %s186 = smul.addr %s185, 8
        %s187 = scalar_lea.vmem %s1, %s186
        %p188 = pneg %p76
        %p189 = pneg %p73
        %p190 = scmp.lt.s32.totalorder %s22, 0
        %s191 = scalar_select %p190, %s22, 0
        %s192 = smul.addr %s191, 8
        %s193 = smul.addr %s192, 8
        %s194 = scalar_lea.vmem %s2, %s193
        %p195 = pneg %p102
        %p196 = pneg %p99
        %p197 = pneg %p128
        %p198 = pneg %p125
        %s199 = sand.u32 %s115, 1
        %s200 = scalar_lea.sflag [#allocation3], %s199
        %s201 = sand.u32 %s115, 1
        %s202 = smul.addr %s201, 8
        %s203 = scalar_lea.vmem [#allocation2], %s202
        %p204 = scmp.lt.s32.totalorder %s21, 1
        %s205 = scalar_select %p204, %s21, 1
        %s206 = smul.addr %s205, 8
        %s207 = scalar_lea.vmem %s0, %s206
        %p208 = scmp.lt.s32.totalorder %s22, 0
        %s209 = scalar_select %p208, %s22, 0
        %s210 = smul.addr %s209, 4
        %s211 = smul.addr %s210, 8
        %s212 = scalar_lea.vmem %s1, %s211
        %p213 = scmp.lt.s32.totalorder %s22, 0
        %s214 = scalar_select %p213, %s22, 0
        %s215 = smul.addr %s214, 8
        %s216 = smul.addr %s215, 8
        %s217 = scalar_lea.vmem %s2, %s216
        %p218 = scmp.eq.s32.totalorder %s22, 0
        // Predicated region
        $region33: #{feed_forward.1} parent=31 // pred_check
          %p219 = pneg %p218
        $region34: #{feed_forward.1} parent=31 // pred_check_branch
          %221 = sbr.rel (%p219) target = $region36
        $region35: #{feed_forward.1} parent=31 // pred_region
          %vm222 = vcmask 261120
          %223 = vst.msk [vmem:[%s203] sm:$0xff] %vm222, 0.0
        $region36: #{feed_forward.1} parent=31 // pred_fallthru
          _
        %v224 = vld [vmem:[%s207] sm:$0xff]
        %v225 = vld [vmem:[%s212] sm:$0xff]
        %v226 = vld [vmem:[%s212 + $0x8] sm:$0xff]
        %v227 = vld [vmem:[%s212 + $0x10] sm:$0xff]
        %v228 = vld [vmem:[%s212 + $0x18] sm:$0xff]
        %vm229 = vcmask 261120
        %v231 = vsel %vm229, %v224, 0
        %233 = vmatprep.subr.mxu0 0.0
        %234 = vmatpush1.msra.mxu0 %v225
        %235 = vmatprep.subr.mxu0 0.0
        %236 = vmatpush1.msra.mxu0 %v226
        %237 = vmatprep.subr.mxu0 0.0
        %238 = vmatpush1.msra.mxu0 %v227
        %239 = vmatprep.subr.mxu0 0.0
        %240 = vmatpush1.msra.mxu0 %v228
        %241 = vmatprep.subr.mxu0 0.0
        %242 = vmatpush1.msra.mxu0 0.0
        %243 = vmatprep.subr.mxu0 0.0
        %244 = vmatpush1.msra.mxu0 0.0
        %245 = vmatprep.subr.mxu0 0.0
        %246 = vmatpush1.msra.mxu0 0.0
        %247 = vmatprep.subr.mxu0 0.0
        %248 = vmatpush1.msra.mxu0 0.0
        %249 = vmatprep.subr.mxu0 0.0
        %250 = vmatpush1.msra.mxu0 0.0
        %251 = vmatprep.subr.mxu0 0.0
        %252 = vmatpush1.msra.mxu0 0.0
        %253 = vmatprep.subr.mxu0 0.0
        %254 = vmatpush1.msra.mxu0 0.0
        %255 = vmatprep.subr.mxu0 0.0
        %256 = vmatpush1.msra.mxu0 0.0
        %257 = vmatprep.subr.mxu0 0.0
        %258 = vmatpush1.msra.mxu0 0.0
        %259 = vmatprep.subr.mxu0 0.0
        %260 = vmatpush1.msra.mxu0 0.0
        %261 = vmatprep.subr.mxu0 0.0
        %262 = vmatpush1.msra.mxu0 0.0
        %263 = vmatprep.subr.mxu0 0.0
        %264 = vmatpush1.msra.mxu0 0.0
        %265 = vmatprep.subr.mxu0 0.0
        %266 = vmatpush1.msra.mxu0 0.0
        %267 = vmatprep.subr.mxu0 0.0
        %268 = vmatpush1.msra.mxu0 0.0
        %269 = vmatprep.subr.mxu0 0.0
        %270 = vmatpush1.msra.mxu0 0.0
        %271 = vmatprep.subr.mxu0 0.0
        %272 = vmatpush1.msra.mxu0 0.0
        %273 = vmatprep.subr.mxu0 0.0
        %274 = vmatpush1.msra.mxu0 0.0
        %275 = vmatprep.subr.mxu0 0.0
        %276 = vmatpush1.msra.mxu0 0.0
        %277 = vmatprep.subr.mxu0 0.0
        %278 = vmatpush1.msra.mxu0 0.0
        %279 = vmatprep.subr.mxu0 0.0
        %280 = vmatpush1.msra.mxu0 0.0
        %281 = vmatprep.subr.mxu0 0.0
        %282 = vmatpush1.msra.mxu0 0.0
        %283 = vmatprep.subr.mxu0 0.0
        %284 = vmatpush1.msra.mxu0 0.0
        %285 = vmatprep.subr.mxu0 0.0
        %286 = vmatpush1.msra.mxu0 0.0
        %287 = vmatprep.subr.mxu0 0.0
        %288 = vmatpush1.msra.mxu0 0.0
        %289 = vmatprep.subr.mxu0 0.0
        %290 = vmatpush1.msra.mxu0 0.0
        %291 = vmatprep.subr.mxu0 0.0
        %292 = vmatpush1.msra.mxu0 0.0
        %293 = vmatprep.subr.mxu0 0.0
        %294 = vmatpush1.msra.mxu0 0.0
        %295 = vmatprep.subr.mxu0 0.0
        %296 = vmatpush1.msra.mxu0 0.0
        %297 = vmatprep.mubr.f32.mxu0 0.0
        %298 = vmatmul.mubr.f32.gmra.mrb[0].mxu0 %v231
        %v299 = vpop.f32.mrb[0].mxu0
        %v300 = vadd.f32 0.0, %v299
        %v301 = vpop.f32.mrb[0].mxu0
        %302 = vdwg.mxu0
        %v303 = vmax.f32 %v300, 0.0
        %v304 = vld [vmem:[%s203] sm:$0xff]
        %v305 = vld [vmem:[%s217] sm:$0xff]
        %v306 = vld [vmem:[%s217 + $0x8] sm:$0xff]
        %v307 = vld [vmem:[%s217 + $0x10] sm:$0xff]
        %v308 = vld [vmem:[%s217 + $0x18] sm:$0xff]
        %v309 = vld [vmem:[%s217 + $0x20] sm:$0xff]
        %v310 = vld [vmem:[%s217 + $0x28] sm:$0xff]
        %v311 = vld [vmem:[%s217 + $0x30] sm:$0xff]
        %v312 = vld [vmem:[%s217 + $0x38] sm:$0xff]
        %vm313 = vcmask 523264
        %v315 = vsel %vm313, %v303, 0
        %317 = vmatprep.subr.mxu0 0.0
        %318 = vmatpush1.msra.mxu0 %v305
        %319 = vmatprep.subr.mxu0 0.0
        %320 = vmatpush1.msra.mxu0 %v306
        %321 = vmatprep.subr.mxu0 0.0
        %322 = vmatpush1.msra.mxu0 %v307
        %323 = vmatprep.subr.mxu0 0.0
        %324 = vmatpush1.msra.mxu0 %v308
        %325 = vmatprep.subr.mxu0 0.0
        %326 = vmatpush1.msra.mxu0 %v309
        %327 = vmatprep.subr.mxu0 0.0
        %328 = vmatpush1.msra.mxu0 %v310
        %329 = vmatprep.subr.mxu0 0.0
        %330 = vmatpush1.msra.mxu0 %v311
        %331 = vmatprep.subr.mxu0 0.0
        %332 = vmatpush1.msra.mxu0 %v312
        %333 = vmatprep.subr.mxu0 0.0
        %334 = vmatpush1.msra.mxu0 0.0
        %335 = vmatprep.subr.mxu0 0.0
        %336 = vmatpush1.msra.mxu0 0.0
        %337 = vmatprep.subr.mxu0 0.0
        %338 = vmatpush1.msra.mxu0 0.0
        %339 = vmatprep.subr.mxu0 0.0
        %340 = vmatpush1.msra.mxu0 0.0
        %341 = vmatprep.subr.mxu0 0.0
        %342 = vmatpush1.msra.mxu0 0.0
        %343 = vmatprep.subr.mxu0 0.0
        %344 = vmatpush1.msra.mxu0 0.0
        %345 = vmatprep.subr.mxu0 0.0
        %346 = vmatpush1.msra.mxu0 0.0
        %347 = vmatprep.subr.mxu0 0.0
        %348 = vmatpush1.msra.mxu0 0.0
        %349 = vmatprep.subr.mxu0 0.0
        %350 = vmatpush1.msra.mxu0 0.0
        %351 = vmatprep.subr.mxu0 0.0
        %352 = vmatpush1.msra.mxu0 0.0
        %353 = vmatprep.subr.mxu0 0.0
        %354 = vmatpush1.msra.mxu0 0.0
        %355 = vmatprep.subr.mxu0 0.0
        %356 = vmatpush1.msra.mxu0 0.0
        %357 = vmatprep.subr.mxu0 0.0
        %358 = vmatpush1.msra.mxu0 0.0
        %359 = vmatprep.subr.mxu0 0.0
        %360 = vmatpush1.msra.mxu0 0.0
        %361 = vmatprep.subr.mxu0 0.0
        %362 = vmatpush1.msra.mxu0 0.0
        %363 = vmatprep.subr.mxu0 0.0
        %364 = vmatpush1.msra.mxu0 0.0
        %365 = vmatprep.subr.mxu0 0.0
        %366 = vmatpush1.msra.mxu0 0.0
        %367 = vmatprep.subr.mxu0 0.0
        %368 = vmatpush1.msra.mxu0 0.0
        %369 = vmatprep.subr.mxu0 0.0
        %370 = vmatpush1.msra.mxu0 0.0
        %371 = vmatprep.subr.mxu0 0.0
        %372 = vmatpush1.msra.mxu0 0.0
        %373 = vmatprep.subr.mxu0 0.0
        %374 = vmatpush1.msra.mxu0 0.0
        %375 = vmatprep.subr.mxu0 0.0
        %376 = vmatpush1.msra.mxu0 0.0
        %377 = vmatprep.subr.mxu0 0.0
        %378 = vmatpush1.msra.mxu0 0.0
        %379 = vmatprep.subr.mxu0 0.0
        %380 = vmatpush1.msra.mxu0 0.0
        %381 = vmatprep.mubr.f32.mxu0 0.0
        %382 = vmatmul.mubr.f32.gmra.mrb[0].mxu0 %v315
        %v383 = vpop.f32.mrb[0].mxu0
        %v384 = vadd.f32 0.0, %v383
        %v385 = vpop.f32.mrb[0].mxu0
        %386 = vdwg.mxu0
        %v387 = vadd.f32 %v304, %v384
        %388 = vst.msk [vmem:[%s203] sm:$0xff] %vm229, %v387
        %s389 = sand.u32 %s115, 1
        %s390 = scalar_lea.sflag [#allocation3], %s389
        %s391 = sand.u32 %s115, 1
        %s392 = smul.addr %s391, 8
        %s393 = scalar_lea.vmem [#allocation2], %s392
        // Predicated region
        $region37: #{feed_forward.1} parent=31 // pred_check
          %p394 = pneg %p125
        $region38: #{feed_forward.1} parent=31 // pred_check_branch
          %396 = sbr.rel (%p394) target = $region40
        $region39: #{feed_forward.1} parent=31 // pred_region
          %s398 = ssub.s32 128, 128
          %399 = vsyncadd %s390, %s398
          %s400 = smul.addr %s21, 128
          %s401 = scalar_lea.hbm %s3, %s400
          %s403 = sshll.u32 %s393, 4
          %s404 = int_to_ptr.vmem [resolvable:$true] %s403
          %406 = dma.vmem_to_hbm [thread:$0]  %s404, 128, %s401, %s390
        $region40: #{feed_forward.1} parent=31 // pred_fallthru
          _
      $region32: #{feed_forward.1} parent=5 // pred_fallthru
        _
      %p407 = scmp.le.s32.totalorder 2, %s12
      // Predicated region
      $region41: #{feed_forward.1} parent=5 // pred_check
        %p408 = pneg %p407
      $region42: #{feed_forward.1} parent=5 // pred_check_branch
        %410 = sbr.rel (%p408) target = $region44
      $region43: #{feed_forward.1} parent=5 // pred_region
        %s411 = ssub.s32 %s12, 2
        // Predicated region
        $region45: #{feed_forward.1} parent=43 // pred_check
          %p412 = pneg %p131
        $region46: #{feed_forward.1} parent=43 // pred_check_branch
          %414 = sbr.rel (%p412) target = $region48
        $region47: #{feed_forward.1} parent=43 // pred_region
          %s415 = sand.u32 %s116, 1
          %s416 = scalar_lea.sflag [#allocation3], %s415
          %s417 = sand.u32 %s116, 1
          %s418 = smul.addr %s417, 8
          %s419 = scalar_lea.vmem [#allocation2], %s418
          %420 = dma.done %s416, 128
        $region48: #{feed_forward.1} parent=43 // pred_fallthru
          _
      $region44: #{feed_forward.1} parent=5 // pred_fallthru
        _
    $region6: #{feed_forward.1} parent=1 // loop_footer
      %s16 = sadd.s32 1, %s12
    $region7: #{feed_forward.1} parent=1 // loop_footer_branch
      %11 = sbr.rel target = $region3
    $region8: #{feed_forward.1} parent=1 // loop_exit
      _
    %421 = vsyncpa [#allocation3], 1
    %s422 = scalar_lea.sflag [#allocation3], 1
    %423 = vsyncpa %s422, 1

</llo_original>
